<compile_context>
chip_gen: v5e
topology: v5e:2x2
jax: 0.10.0
libtpu: 0.0.40
codegen_flags: <defaults>
</compile_context>

<pallas_src>
import functools

import jax
import jax.numpy as jnp
from jax.experimental import pallas as pl
from jax.experimental.pallas import tpu as pltpu

LATENT = 32
C_IN = 5
C_OUT = 3


def _round_up(x, m):
    return ((x + m - 1) // m) * m


def _largest_divisor_leq(n, k):
    k = max(1, min(n, k))
    for d in range(k, 0, -1):
        if n % d == 0:
            return d
    return 1


def dcnn_kernel(x_ref, w_ref, b_ref, o_ref, *, bblk):
    # x_ref: (bblk, C_IN, TPIX) f32   w_ref: (4, 32, 32) bf16
    # b_ref: (4, 32, 1) f32           o_ref: (bblk, C_OUT, TPIX) f32
    w1 = w_ref[0, :, :C_IN]          # (32, 5)  bf16
    w2 = w_ref[1]                    # (32, 32) bf16
    w3 = w_ref[2]                    # (32, 32) bf16
    w4 = w_ref[3, :C_OUT, :]         # (3, 32)  bf16
    b1 = b_ref[0]                    # (32, 1)  f32
    b2 = b_ref[1]
    b3 = b_ref[2]
    b4 = b_ref[3, :C_OUT]            # (3, 1)   f32

    for bi in range(bblk):           # bblk is small & static; per-image 2D dots avoid transposes
        x = x_ref[bi]                                                   # (5, TPIX) f32
        # bf16 operands, f32 accumulation; bias/ReLU/residual stay f32 on the VPU.
        h = jnp.dot(w1, x.astype(jnp.bfloat16),
                    preferred_element_type=jnp.float32) + b1            # (32, TPIX) f32
        h = jnp.maximum(h, 0.0).astype(jnp.bfloat16)
        h = jnp.dot(w2, h, preferred_element_type=jnp.float32) + b2
        h = jnp.maximum(h, 0.0).astype(jnp.bfloat16)
        h = jnp.dot(w3, h, preferred_element_type=jnp.float32) + b3
        h = jnp.maximum(h, 0.0).astype(jnp.bfloat16)
        out = jnp.dot(w4, h, preferred_element_type=jnp.float32) + b4   # (3, TPIX) f32
        # residual: + x[:, :3, ...] in NCHW == first 3 channel rows (original f32 x)
        o_ref[bi] = out + x[:C_OUT, :]


def pack_params(params):
    """Pack the 4 conv weights (Cout, Cin) into one bf16 operand, biases into one f32 operand."""
    (w1, b1), (w2, b2), (w3, b3), (w4, b4) = params
    w_pack = jnp.zeros((4, LATENT, LATENT), jnp.bfloat16)
    w_pack = w_pack.at[0, :, :C_IN].set(w1.astype(jnp.bfloat16))    # (32, 5)
    w_pack = w_pack.at[1].set(w2.astype(jnp.bfloat16))              # (32, 32)
    w_pack = w_pack.at[2].set(w3.astype(jnp.bfloat16))              # (32, 32)
    w_pack = w_pack.at[3, :C_OUT, :].set(w4.astype(jnp.bfloat16))   # (3, 32)
    b_pack = jnp.zeros((4, LATENT, 1), jnp.float32)
    b_pack = b_pack.at[0, :, 0].set(b1)
    b_pack = b_pack.at[1, :, 0].set(b2)
    b_pack = b_pack.at[2, :, 0].set(b3)
    b_pack = b_pack.at[3, :C_OUT, 0].set(b4)
    return w_pack, b_pack


@functools.partial(jax.jit, static_argnames=("tpix",))
def dcnn_forward(x_nchw, params, *, tpix=16384):
    """x_nchw: (B, 5, H, W) float32 -> (B, 3, H, W) float32."""
    B, C, H, W = x_nchw.shape
    assert C == C_IN
    HW = H * W
    tpix_target = max(128, (int(tpix) // 128) * 128)

    # ---- pixel tiling: lane-dense tiles, never a partial tail ----
    hw128 = _round_up(HW, 128)
    n_tiles = -(-hw128 // tpix_target)
    if B == 1 and n_tiles == 1 and hw128 >= 256:
        n_tiles = 2                                   # keep both v7x TensorCores busy
    tpix_eff = _round_up(-(-hw128 // n_tiles), 128)
    hw_pad = n_tiles * tpix_eff

    # ---- batch blocking: amortize per-grid-step overhead for small images ----
    if n_tiles == 1:
        desired = max(1, min(32, 8192 // tpix_eff))
        if B >= 2:
            desired = min(desired, B // 2)            # guarantee >=2 parallel grid units (v7x)
        bblk = _largest_divisor_leq(B, max(1, desired))
    else:
        bblk = 1
    grid = (B // bblk, n_tiles)

    # NCHW -> (B, C, H*W): pure reshape (channel-major already), no HBM transpose passes.
    x_flat = x_nchw.reshape(B, C_IN, HW)
    if hw_pad != HW:
        x_flat = jnp.pad(x_flat, ((0, 0), (0, 0), (0, hw_pad - HW)))  # zero tail: no stale reads

    w_pack, b_pack = pack_params(params)

    flops = 2 * (LATENT * C_IN + 2 * LATENT * LATENT + C_OUT * LATENT) * B * hw_pad
    bytes_accessed = (C_IN + C_OUT) * 4 * B * hw_pad + w_pack.size * 2 + b_pack.size * 4

    out_flat = pl.pallas_call(
        functools.partial(dcnn_kernel, bblk=bblk),
        out_shape=jax.ShapeDtypeStruct((B, C_OUT, hw_pad), jnp.float32),
        grid_spec=pltpu.PrefetchScalarGridSpec(
            num_scalar_prefetch=0,
            grid=grid,
            in_specs=[
                pl.BlockSpec((bblk, C_IN, tpix_eff), lambda b, j: (b, 0, j)),
                # Constant index_maps: weights/biases stay resident, no per-step refetch.
                pl.BlockSpec((4, LATENT, LATENT), lambda b, j: (0, 0, 0)),
                pl.BlockSpec((4, LATENT, 1), lambda b, j: (0, 0, 0)),
            ],
            out_specs=pl.BlockSpec((bblk, C_OUT, tpix_eff), lambda b, j: (b, 0, j)),
        ),
        compiler_params=pltpu.CompilerParams(
            dimension_semantics=("parallel", "parallel"),
            vmem_limit_bytes=32 * 1024 * 1024),
        cost_estimate=pl.CostEstimate(
            flops=flops, transcendentals=0, bytes_accessed=bytes_accessed),
    )(x_flat, w_pack, b_pack)

    if hw_pad != HW:
        out_flat = out_flat[:, :, :HW]
    return out_flat.reshape(B, C_OUT, H, W)


def init_params(key):
    """Deterministic init matching PyTorch Conv2d(k=1) defaults.
    Weights kept in conv-native (Cout, Cin) layout; biases as (Cout,)."""
    dims = [(LATENT, C_IN), (LATENT, LATENT), (LATENT, LATENT), (C_OUT, LATENT)]
    params = []
    for (cout, cin) in dims:
        key, kw, kb = jax.random.split(key, 3)
        bound = 1.0 / jnp.sqrt(cin)
        w = jax.random.uniform(kw, (cout, cin), jnp.float32, -bound, bound)
        b = jax.random.uniform(kb, (cout,), jnp.float32, -bound, bound)
        params.append((w, b))
    return params


def dcnn_reference(x_nchw, params):
    """Plain-JAX f32 reference of the PyTorch forward."""
    (w1, b1), (w2, b2), (w3, b3), (w4, b4) = params
    B, C, H, W = x_nchw.shape
    xf = jnp.transpose(x_nchw, (0, 2, 3, 1)).reshape(-1, C_IN)
    z = jnp.maximum(xf @ w1.T + b1, 0.0)
    z = jnp.maximum(z @ w2.T + b2, 0.0)
    z = jnp.maximum(z @ w3.T + b3, 0.0)
    z = z @ w4.T + b4 + xf[:, :C_OUT]
    return jnp.transpose(z.reshape(B, H, W, C_OUT), (0, 3, 1, 2))


if __name__ == "__main__":
    key = jax.random.PRNGKey(0)
    key, kx = jax.random.split(key)
    x = jax.random.normal(kx, (2, 5, 16, 16), dtype=jnp.float32)  # NCHW, 5 in-channels
    params = init_params(key)

    out = jax.block_until_ready(dcnn_forward(x, params))
    ref = dcnn_reference(x, params)

    assert out.shape == (2, 3, 16, 16)
    # bf16 matmul operands with f32 accumulation -> loosened tolerance vs the f32 reference.
    max_err = float(jnp.max(jnp.abs(out - ref)))
    assert jnp.allclose(out, ref, atol=5e-2, rtol=5e-2), max_err
    # TODO(synk): .loss()/.sample() are trivial host-side wrappers (MSE / detach) left in JAX.
    print("KERNEL_OK")
</pallas_src>

<mosaic_0001>
module attributes {stable_mosaic.version = 11 : i64} {
  func.func @dcnn_kernel(%arg0: i32, %arg1: i32, %arg2: memref<1x5x256xf32, #tpu.memory_space<vmem>>, %arg3: memref<4x32x32xbf16, #tpu.memory_space<vmem>>, %arg4: memref<4x32x1xf32, #tpu.memory_space<vmem>>, %arg5: memref<1x3x256xf32, #tpu.memory_space<vmem>>) attributes {dimension_semantics = [#tpu.dimension_semantics<parallel>, #tpu.dimension_semantics<parallel>], iteration_bounds = array<i64: 2, 1>, scalar_prefetch = 0 : i64, scratch_operands = 0 : i64, tpu.core_type = #tpu.core_type<tc>, window_params = [{transform_indices = @transform_0, window_bounds = array<i64: 1, 5, 256>}, {pipeline_mode = #tpu.pipeline_mode<synchronous>, transform_indices = @transform_1, window_bounds = array<i64: 4, 32, 32>}, {pipeline_mode = #tpu.pipeline_mode<synchronous>, transform_indices = @transform_2, window_bounds = array<i64: 4, 32, 1>}, {transform_indices = @transform_3, window_bounds = array<i64: 1, 3, 256>}]} {
    %c0 = arith.constant 0 : index
    %c0_0 = arith.constant 0 : index
    %c0_1 = arith.constant 0 : index
    %0 = vector.load %arg3[%c0, %c0_0, %c0_1] : memref<4x32x32xbf16, #tpu.memory_space<vmem>>, vector<1x32x5xbf16>
    %1 = vector.shape_cast %0 : vector<1x32x5xbf16> to vector<32x5xbf16>
    %c1 = arith.constant 1 : index
    %c0_2 = arith.constant 0 : index
    %c0_3 = arith.constant 0 : index
    %2 = vector.load %arg3[%c1, %c0_2, %c0_3] : memref<4x32x32xbf16, #tpu.memory_space<vmem>>, vector<1x32x32xbf16>
    %3 = vector.shape_cast %2 : vector<1x32x32xbf16> to vector<32x32xbf16>
    %c2 = arith.constant 2 : index
    %c0_4 = arith.constant 0 : index
    %c0_5 = arith.constant 0 : index
    %4 = vector.load %arg3[%c2, %c0_4, %c0_5] : memref<4x32x32xbf16, #tpu.memory_space<vmem>>, vector<1x32x32xbf16>
    %5 = vector.shape_cast %4 : vector<1x32x32xbf16> to vector<32x32xbf16>
    %c3 = arith.constant 3 : index
    %c0_6 = arith.constant 0 : index
    %c0_7 = arith.constant 0 : index
    %6 = vector.load %arg3[%c3, %c0_6, %c0_7] : memref<4x32x32xbf16, #tpu.memory_space<vmem>>, vector<1x3x32xbf16>
    %7 = vector.shape_cast %6 : vector<1x3x32xbf16> to vector<3x32xbf16>
    %c0_8 = arith.constant 0 : index
    %c0_9 = arith.constant 0 : index
    %c0_10 = arith.constant 0 : index
    %8 = vector.load %arg4[%c0_8, %c0_9, %c0_10] : memref<4x32x1xf32, #tpu.memory_space<vmem>>, vector<1x32x1xf32>
    %9 = vector.shape_cast %8 : vector<1x32x1xf32> to vector<32x1xf32>
    %c1_11 = arith.constant 1 : index
    %c0_12 = arith.constant 0 : index
    %c0_13 = arith.constant 0 : index
    %10 = vector.load %arg4[%c1_11, %c0_12, %c0_13] : memref<4x32x1xf32, #tpu.memory_space<vmem>>, vector<1x32x1xf32>
    %11 = vector.shape_cast %10 : vector<1x32x1xf32> to vector<32x1xf32>
    %c2_14 = arith.constant 2 : index
    %c0_15 = arith.constant 0 : index
    %c0_16 = arith.constant 0 : index
    %12 = vector.load %arg4[%c2_14, %c0_15, %c0_16] : memref<4x32x1xf32, #tpu.memory_space<vmem>>, vector<1x32x1xf32>
    %13 = vector.shape_cast %12 : vector<1x32x1xf32> to vector<32x1xf32>
    %c3_17 = arith.constant 3 : index
    %c0_18 = arith.constant 0 : index
    %c0_19 = arith.constant 0 : index
    %14 = vector.load %arg4[%c3_17, %c0_18, %c0_19] : memref<4x32x1xf32, #tpu.memory_space<vmem>>, vector<1x3x1xf32>
    %15 = vector.shape_cast %14 : vector<1x3x1xf32> to vector<3x1xf32>
    %c0_20 = arith.constant 0 : index
    %c0_21 = arith.constant 0 : index
    %c0_22 = arith.constant 0 : index
    %16 = vector.load %arg2[%c0_20, %c0_21, %c0_22] : memref<1x5x256xf32, #tpu.memory_space<vmem>>, vector<1x5x256xf32>
    %17 = vector.shape_cast %16 : vector<1x5x256xf32> to vector<5x256xf32>
    %18 = arith.truncf %17 : vector<5x256xf32> to vector<5x256xbf16>
    %cst = arith.constant dense<0.000000e+00> : vector<32x256xf32>
    %19 = tpu.matmul %1, %18, %cst {dimension_numbers = #tpu.dot_dimension_numbers<[1], [0], [0], [1], [0, 0, 1, 1], [], []>} : vector<32x5xbf16>, vector<5x256xbf16>, vector<32x256xf32> -> vector<32x256xf32>
    %20 = vector.broadcast %9 : vector<32x1xf32> to vector<32x256xf32>
    %21 = arith.addf %19, %20 : vector<32x256xf32>
    %cst_23 = arith.constant 0.000000e+00 : f32
    %22 = vector.broadcast %cst_23 : f32 to vector<32x256xf32>
    %23 = arith.maximumf %21, %22 : vector<32x256xf32>
    %24 = arith.truncf %23 : vector<32x256xf32> to vector<32x256xbf16>
    %cst_24 = arith.constant dense<0.000000e+00> : vector<32x256xf32>
    %25 = tpu.matmul %3, %24, %cst_24 {dimension_numbers = #tpu.dot_dimension_numbers<[1], [0], [0], [1], [0, 0, 1, 1], [], []>} : vector<32x32xbf16>, vector<32x256xbf16>, vector<32x256xf32> -> vector<32x256xf32>
    %26 = vector.broadcast %11 : vector<32x1xf32> to vector<32x256xf32>
    %27 = arith.addf %25, %26 : vector<32x256xf32>
    %cst_25 = arith.constant 0.000000e+00 : f32
    %28 = vector.broadcast %cst_25 : f32 to vector<32x256xf32>
    %29 = arith.maximumf %27, %28 : vector<32x256xf32>
    %30 = arith.truncf %29 : vector<32x256xf32> to vector<32x256xbf16>
    %cst_26 = arith.constant dense<0.000000e+00> : vector<32x256xf32>
    %31 = tpu.matmul %5, %30, %cst_26 {dimension_numbers = #tpu.dot_dimension_numbers<[1], [0], [0], [1], [0, 0, 1, 1], [], []>} : vector<32x32xbf16>, vector<32x256xbf16>, vector<32x256xf32> -> vector<32x256xf32>
    %32 = vector.broadcast %13 : vector<32x1xf32> to vector<32x256xf32>
    %33 = arith.addf %31, %32 : vector<32x256xf32>
    %cst_27 = arith.constant 0.000000e+00 : f32
    %34 = vector.broadcast %cst_27 : f32 to vector<32x256xf32>
    %35 = arith.maximumf %33, %34 : vector<32x256xf32>
    %36 = arith.truncf %35 : vector<32x256xf32> to vector<32x256xbf16>
    %cst_28 = arith.constant dense<0.000000e+00> : vector<3x256xf32>
    %37 = tpu.matmul %7, %36, %cst_28 {dimension_numbers = #tpu.dot_dimension_numbers<[1], [0], [0], [1], [0, 0, 1, 1], [], []>} : vector<3x32xbf16>, vector<32x256xbf16>, vector<3x256xf32> -> vector<3x256xf32>
    %38 = vector.broadcast %15 : vector<3x1xf32> to vector<3x256xf32>
    %39 = arith.addf %37, %38 : vector<3x256xf32>
    %40 = vector.extract_strided_slice %17 {offsets = [0, 0], sizes = [3, 256], strides = [1, 1]} : vector<5x256xf32> to vector<3x256xf32>
    %41 = arith.addf %39, %40 : vector<3x256xf32>
    %c0_29 = arith.constant 0 : index
    %c0_30 = arith.constant 0 : index
    %c0_31 = arith.constant 0 : index
    %42 = vector.load %arg5[%c0_29, %c0_30, %c0_31] : memref<1x3x256xf32, #tpu.memory_space<vmem>>, vector<1x3x256xf32>
    %43 = vector.shape_cast %42 : vector<1x3x256xf32> to vector<3x256xf32>
    %44 = vector.shape_cast %41 : vector<3x256xf32> to vector<1x3x256xf32>
    tpu.vector_store %arg5[%c0_29, %c0_30, %c0_31], %44 {strides = array<i32>} : memref<1x3x256xf32, #tpu.memory_space<vmem>>, vector<1x3x256xf32>,
    return
  }
  func.func @transform_0(%arg0: i32, %arg1: i32) -> (i32, i32, i32) {
    %c0_i32 = arith.constant 0 : i32
    %c0_i32_0 = arith.constant 0 : i32
    return %arg0, %c0_i32, %arg1 : i32, i32, i32
  }
  func.func @transform_1(%arg0: i32, %arg1: i32) -> (i32, i32, i32) {
    %c0_i32 = arith.constant 0 : i32
    %c0_i32_0 = arith.constant 0 : i32
    %c0_i32_1 = arith.constant 0 : i32
    %c0_i32_2 = arith.constant 0 : i32
    return %c0_i32, %c0_i32_0, %c0_i32_1 : i32, i32, i32
  }
  func.func @transform_2(%arg0: i32, %arg1: i32) -> (i32, i32, i32) {
    %c0_i32 = arith.constant 0 : i32
    %c0_i32_0 = arith.constant 0 : i32
    %c0_i32_1 = arith.constant 0 : i32
    %c0_i32_2 = arith.constant 0 : i32
    return %c0_i32, %c0_i32_0, %c0_i32_1 : i32, i32, i32
  }
  func.func @transform_3(%arg0: i32, %arg1: i32) -> (i32, i32, i32) {
    %c0_i32 = arith.constant 0 : i32
    %c0_i32_0 = arith.constant 0 : i32
    return %arg0, %c0_i32, %arg1 : i32, i32, i32
  }
}

</mosaic_0001>

<llo_original>
// kernel: dcnn_forward.1
$region0: #{dcnn_forward.1}
  #allocation0 [shape = 'u32[]', space=smem, size = 0x4, offset = 0x4, fixed_abs, tag = 'smem constant byte address 0x4 - core index']
  #allocation1 [shape = 'u32[72,128]{1,0:T(1,128)}', space=vmem, size = 0x9000, scoped, tag = 'internal scratch']
  %s0 = inlined_call_operand.vmem [shape: f32[2,5,256], index: 0, kind: input, shape index: {}]
  %s1 = inlined_call_operand.vmem [shape: bf16[4,32,32], index: 1, kind: input, shape index: {}]
  %s2 = inlined_call_operand.vmem [shape: f32[4,32,1], index: 2, kind: input, shape index: {}]
  %s3 = inlined_call_operand.vmem [shape: f32[2,3,256], index: 3, kind: output, shape index: {}]
  %s4 = sld [smem:[#allocation0]]
  $region45: #{dcnn_forward.1} parent=0
    _
  %s6 = ssub.s32 1, %s4
  %s7 = scalar_select 0, %s6, %s4
  loop: start=0, step=1, limit=4
  $region2: #{dcnn_forward.1} parent=0 // loop_pre_header
    _
  $region3: #{dcnn_forward.1} parent=0 // loop_header
    %s9 = sphi 0, %s13
    %p10 = scmp.ge.s32.totalorder %s9, 4
    %s16 = sphi 0, %s28
    %s17 = sphi 0, %s24
    %s18 = sphi 0, %s16
    %s19 = sphi 0, %s17
    %s20 = sphi 0, %s18
    %s21 = sphi 0, %s19
    %s33 = sphi 0, %s35
    %s36 = sphi 0, %s33
    %s37 = sphi 0, %s36
    %s53 = sphi 0, %s37
    %s57 = sphi 0, %s57
    %s59 = sphi 0, %s57
    %s60 = sphi 0, %s59
    %s74 = sphi 0, %s60
    %s78 = sphi 0, %s78
    %s80 = sphi 0, %s78
    %s81 = sphi 0, %s80
    %s95 = sphi 0, %s81
    %s103 = sphi 0, %s105
    %s106 = sphi 0, %s103
    %s107 = sphi 0, %s106
    %s123 = sphi 0, %s107
  $region4: #{dcnn_forward.1} parent=0 // loop_header_branch
    %12 = sbr.rel (%p10) target = $region8
  $region5: #{dcnn_forward.1} parent=0 // loop_body
    %s14 = ssub.s32 %s9, 1
    %s15 = ssub.s32 %s9, 2
    %s22 = sadd.s32 1, %s17
    %p23 = scmp.ge.s32.totalorder %s22, 1
    %s24 = scalar_select %p23, 0, %s22
    %s25 = sadd.s32 1, %s16
    %s26 = scalar_select %p23, %s25, %s16
    %p27 = scmp.ge.s32.totalorder %s26, 2
    %s28 = scalar_select %p27, 0, %s26
    %s29 = ssub.s32 %s16, %s28
    %s30 = ssub.s32 %s17, %s24
    %s31 = sor.u32 %s29, %s30
    %p32 = scmp.eq.s32.totalorder %s31, 0
    %s34 = sadd.s32 %s33, 1
    %s35 = scalar_select %p32, %s33, %s34
    %p38 = pneg %p32
    %p39 = scmp.eq.s32.totalorder %s9, 1
    %p40 = por %p38, %p39
    %p41 = scmp.ne.s32.totalorder %s33, %s36
    %p42 = scmp.eq.s32.totalorder %s9, 0
    %p43 = por %p41, %p42
    %p44 = scmp.ne.s32.totalorder %s33, %s36
    %p45 = scmp.eq.s32.totalorder %s14, 1
    %p46 = por %p44, %p45
    %p47 = scmp.ne.s32.totalorder %s36, %s37
    %p48 = scmp.eq.s32.totalorder %s14, 0
    %p49 = por %p47, %p48
    %p50 = scmp.ne.s32.totalorder %s36, %s37
    %p51 = scmp.eq.s32.totalorder %s15, 1
    %p52 = por %p50, %p51
    %p54 = scmp.ne.s32.totalorder %s37, %s53
    %p55 = scmp.eq.s32.totalorder %s15, 0
    %p56 = por %p54, %p55
    %s58 = sadd.s32 %s57, 1
    %p61 = scmp.eq.s32.totalorder %s9, 1
    %p62 = scmp.ne.s32.totalorder %s57, %s59
    %p63 = scmp.eq.s32.totalorder %s9, 0
    %p64 = por %p62, %p63
    %p65 = scmp.ne.s32.totalorder %s57, %s59
    %p66 = scmp.eq.s32.totalorder %s14, 1
    %p67 = por %p65, %p66
    %p68 = scmp.ne.s32.totalorder %s59, %s60
    %p69 = scmp.eq.s32.totalorder %s14, 0
    %p70 = por %p68, %p69
    %p71 = scmp.ne.s32.totalorder %s59, %s60
    %p72 = scmp.eq.s32.totalorder %s15, 1
    %p73 = por %p71, %p72
    %p75 = scmp.ne.s32.totalorder %s60, %s74
    %p76 = scmp.eq.s32.totalorder %s15, 0
    %p77 = por %p75, %p76
    %s79 = sadd.s32 %s78, 1
    %p82 = scmp.eq.s32.totalorder %s9, 1
    %p83 = scmp.ne.s32.totalorder %s78, %s80
    %p84 = scmp.eq.s32.totalorder %s9, 0
    %p85 = por %p83, %p84
    %p86 = scmp.ne.s32.totalorder %s78, %s80
    %p87 = scmp.eq.s32.totalorder %s14, 1
    %p88 = por %p86, %p87
    %p89 = scmp.ne.s32.totalorder %s80, %s81
    %p90 = scmp.eq.s32.totalorder %s14, 0
    %p91 = por %p89, %p90
    %p92 = scmp.ne.s32.totalorder %s80, %s81
    %p93 = scmp.eq.s32.totalorder %s15, 1
    %p94 = por %p92, %p93
    %p96 = scmp.ne.s32.totalorder %s81, %s95
    %p97 = scmp.eq.s32.totalorder %s15, 0
    %p98 = por %p96, %p97
    %s99 = ssub.s32 %s16, %s28
    %s100 = ssub.s32 %s17, %s24
    %s101 = sor.u32 %s99, %s100
    %p102 = scmp.eq.s32.totalorder %s101, 0
    %s104 = sadd.s32 %s103, 1
    %s105 = scalar_select %p102, %s103, %s104
    %p108 = pneg %p102
    %p109 = scmp.eq.s32.totalorder %s9, 1
    %p110 = por %p108, %p109
    %p111 = scmp.ne.s32.totalorder %s103, %s106
    %p112 = scmp.eq.s32.totalorder %s9, 0
    %p113 = por %p111, %p112
    %p114 = scmp.ne.s32.totalorder %s103, %s106
    %p115 = scmp.eq.s32.totalorder %s14, 1
    %p116 = por %p114, %p115
    %p117 = scmp.ne.s32.totalorder %s106, %s107
    %p118 = scmp.eq.s32.totalorder %s14, 0
    %p119 = por %p117, %p118
    %p120 = scmp.ne.s32.totalorder %s106, %s107
    %p121 = scmp.eq.s32.totalorder %s15, 1
    %p122 = por %p120, %p121
    %p124 = scmp.ne.s32.totalorder %s107, %s123
    %p125 = scmp.eq.s32.totalorder %s15, 0
    %p126 = por %p124, %p125
    %p127 = scmp.le.s32.totalorder 1, %s9
    %p128 = scmp.lt.s32.totalorder %s9, 3
    %p129 = pnand %p127, %p128
    %p130 = pneg %p129
    // Predicated region
    $region9: #{dcnn_forward.1} parent=5 // pred_check
      _
    $region10: #{dcnn_forward.1} parent=5 // pred_check_branch
      %132 = sbr.rel (%p129) target = $region12
    $region11: #{dcnn_forward.1} parent=5 // pred_region
      %s133 = ssub.s32 %s9, 1
      // Predicated region
      $region13: #{dcnn_forward.1} parent=11 // pred_check
        %p134 = pneg %p70
      $region14: #{dcnn_forward.1} parent=11 // pred_check_branch
        %136 = sbr.rel (%p134) target = $region16
      $region15: #{dcnn_forward.1} parent=11 // pred_region
        _
      $region16: #{dcnn_forward.1} parent=11 // pred_fallthru
        _
      // Predicated region
      $region17: #{dcnn_forward.1} parent=11 // pred_check
        %p137 = pneg %p91
      $region18: #{dcnn_forward.1} parent=11 // pred_check_branch
        %139 = sbr.rel (%p137) target = $region20
      $region19: #{dcnn_forward.1} parent=11 // pred_region
        _
      $region20: #{dcnn_forward.1} parent=11 // pred_fallthru
        _
    $region12: #{dcnn_forward.1} parent=5 // pred_fallthru
      _
    %p140 = scmp.lt.s32.totalorder %s9, 2
    // Predicated region
    $region21: #{dcnn_forward.1} parent=5 // pred_check
      %p141 = pneg %p140
    $region22: #{dcnn_forward.1} parent=5 // pred_check_branch
      %143 = sbr.rel (%p141) target = $region24
    $region23: #{dcnn_forward.1} parent=5 // pred_region
      // Predicated region
      $region25: #{dcnn_forward.1} parent=23 // pred_check
        %p144 = pneg %p43
      $region26: #{dcnn_forward.1} parent=23 // pred_check_branch
        %146 = sbr.rel (%p144) target = $region28
      $region27: #{dcnn_forward.1} parent=23 // pred_region
        %s147 = smul.u32 2, %s17
        %p148 = scmp.lt.s32.totalorder %s16, 1
        %s149 = scalar_select %p148, %s16, 1
        %p150 = scmp.lt.s32.totalorder %s147, 1
        %s151 = scalar_select %p150, %s147, 1
        %s152 = smul.addr %s149, 2
        %s153 = sadd.s32 %s151, %s152
        %s154 = smul.addr %s153, 8
        %s155 = scalar_lea.vmem %s0, %s154
        %s156 = smul.u32 2, %s17
      $region28: #{dcnn_forward.1} parent=23 // pred_fallthru
        _
    $region24: #{dcnn_forward.1} parent=5 // pred_fallthru
      _
    %p157 = scmp.le.s32.totalorder 1, %s9
    %p158 = scmp.lt.s32.totalorder %s9, 3
    %p159 = pnand %p157, %p158
    %p160 = pneg %p159
    // Predicated region
    $region29: #{dcnn_forward.1} parent=5 // pred_check
      _
    $region30: #{dcnn_forward.1} parent=5 // pred_check_branch
      %162 = sbr.rel (%p159) target = $region32
    $region31: #{dcnn_forward.1} parent=5 // pred_region
      %s163 = ssub.s32 %s9, 1
      %s164 = smul.u32 2, %s19
      %p165 = scmp.lt.s32.totalorder %s18, 1
      %s166 = scalar_select %p165, %s18, 1
      %p167 = scmp.lt.s32.totalorder %s164, 1
      %s168 = scalar_select %p167, %s164, 1
      %s169 = smul.addr %s166, 2
      %s170 = sadd.s32 %s168, %s169
      %s171 = smul.addr %s170, 8
      %s172 = scalar_lea.vmem %s0, %s171
      %p173 = pneg %p49
      %p174 = pneg %p46
      %p175 = pneg %p70
      %p176 = pneg %p67
      %p177 = pneg %p91
      %p178 = pneg %p88
      %p179 = pneg %p119
      %p180 = pneg %p116
      %s181 = smul.u32 2, %s19
      %p182 = scmp.lt.s32.totalorder %s18, 1
      %s183 = scalar_select %p182, %s18, 1
      %p184 = scmp.lt.s32.totalorder %s181, 1
      %s185 = scalar_select %p184, %s181, 1
      %s186 = smul.addr %s183, 2
      %s187 = sadd.s32 %s185, %s186
      %s188 = smul.addr %s187, 4
      %s189 = scalar_lea.vmem %s3, %s188
      %s190 = smul.u32 2, %s19
      %p191 = scmp.lt.s32.totalorder %s18, 1
      %s192 = scalar_select %p191, %s18, 1
      %p193 = scmp.lt.s32.totalorder %s190, 1
      %s194 = scalar_select %p193, %s190, 1
      %s195 = smul.addr %s192, 2
      %s196 = sadd.s32 %s194, %s195
      %s197 = smul.addr %s196, 8
      %s198 = scalar_lea.vmem %s0, %s197
      %s199 = smul.u32 2, %s19
      %s200 = smul.u32 2, %s19
      %p201 = scmp.lt.s32.totalorder %s18, 1
      %s202 = scalar_select %p201, %s18, 1
      %p203 = scmp.lt.s32.totalorder %s200, 1
      %s204 = scalar_select %p203, %s200, 1
      %s205 = smul.addr %s202, 2
      %s206 = sadd.s32 %s204, %s205
      %s207 = smul.addr %s206, 4
      %s208 = scalar_lea.vmem %s3, %s207
      %s209 = smul.u32 2, %s19
      %v211 = vld [vmem:[%s1] sm:$0xf]
      %v212 = vld [vmem:[%s1 + $0x4] sm:$0xf]
      %v213 = vld [vmem:[%s1 + $0x8] sm:$0xf]
      %v214 = vld [vmem:[%s1 + $0xc] sm:$0xf]
      %s215 = scalar_lea.vmem %s1, 16
      %v216 = vld [vmem:[%s215] sm:$0xf]
      %v217 = vld [vmem:[%s215 + $0x4] sm:$0xf]
      %v218 = vld [vmem:[%s215 + $0x8] sm:$0xf]
      %v219 = vld [vmem:[%s215 + $0xc] sm:$0xf]
      %s220 = scalar_lea.vmem %s1, 32
      %v221 = vld [vmem:[%s220] sm:$0xf]
      %v222 = vld [vmem:[%s220 + $0x4] sm:$0xf]
      %v223 = vld [vmem:[%s220 + $0x8] sm:$0xf]
      %v224 = vld [vmem:[%s220 + $0xc] sm:$0xf]
      %s225 = scalar_lea.vmem %s1, 48
      %v226 = vld [vmem:[%s225] sm:$0x3]
      %v227 = vld [vmem:[%s2] sm:$0xff]
      %v228 = vld [vmem:[%s2 + $0x8] sm:$0xff]
      %v229 = vld [vmem:[%s2 + $0x10] sm:$0xff]
      %v230 = vld [vmem:[%s2 + $0x18] sm:$0xff]
      %s231 = scalar_lea.vmem %s2, 32
      %v232 = vld [vmem:[%s231] sm:$0xff]
      %v233 = vld [vmem:[%s231 + $0x8] sm:$0xff]
      %v234 = vld [vmem:[%s231 + $0x10] sm:$0xff]
      %v235 = vld [vmem:[%s231 + $0x18] sm:$0xff]
      %s236 = scalar_lea.vmem %s2, 64
      %v237 = vld [vmem:[%s236] sm:$0xff]
      %v238 = vld [vmem:[%s236 + $0x8] sm:$0xff]
      %v239 = vld [vmem:[%s236 + $0x10] sm:$0xff]
      %v240 = vld [vmem:[%s236 + $0x18] sm:$0xff]
      %s241 = scalar_lea.vmem %s2, 96
      %v242 = vld [vmem:[%s241] sm:$0x7]
      %v243 = vld [vmem:[%s198] sm:$0x1f]
      %v244 = vld [vmem:[%s198 + $0x8] sm:$0x1f]
      %v245 = vpack.c.bf16 %v243, %v243
      %v246 = vpack.c.bf16 %v244, %v244
      %248 = vset.pattern.permute.xlu0 0
      %249 = vperm.xlu0 %248, %v227
      %v250 = vpop.permute.xlu0 %249
      %253 = vset.pattern.permute.xlu0 0
      %254 = vperm.xlu0 %253, %v228
      %v255 = vpop.permute.xlu0 %254
      %258 = vset.pattern.permute.xlu0 0
      %259 = vperm.xlu0 %258, %v229
      %v260 = vpop.permute.xlu0 %259
      %263 = vset.pattern.permute.xlu0 0
      %264 = vperm.xlu0 %263, %v230
      %v265 = vpop.permute.xlu0 %264
      %v271 = vunpack.c.l.b16 %v211
      %v272 = vunpack.c.l.b16 %v212
      %v273 = vunpack.c.l.b16 %v213
      %v274 = vunpack.c.l.b16 %v214
      %v275 = vpack.c.b16 %v272, %v271
      %v276 = vpack.c.b16 %v274, %v273
      %vm277 = vcmask 39936
      %v279 = vsel %vm277, %v275, 0
      %v282 = vsel %vm277, %v276, 0
      %vm284 = vcmask 1041408
      %vm285 = vcmask 1042432
      %v286 = vsel %vm284, 4294967295, 65535
      %v287 = vsel %vm285, %v286, 0
      %v289 = vand.u32 %v245, %v287
      %v292 = vand.u32 %v246, %v287
      %294 = vmatpush.bf16.msra.mxu0 0
      %295 = vmatpush.bf16.msra.mxu0 0
      %296 = vmatpush.bf16.msra.mxu0 0
      %297 = vmatpush.bf16.msra.mxu0 0
      %298 = vmatpush.bf16.msra.mxu0 0
      %299 = vmatpush.bf16.msra.mxu0 0
      %300 = vmatpush.bf16.msra.mxu0 0
      %301 = vmatpush.bf16.msra.mxu0 %v289
      %302 = vmatmul.bf16.gmra.mxu0 %v279
      %v303 = vpop.f32.mrf.mxu0
      %v304 = vadd.f32 %v250, %v303
      %v305 = vpop.f32.mrf.mxu0
      %v306 = vadd.f32 %v255, %v305
      %307 = vmatmul.bf16.gmra.mxu0 %v282
      %v308 = vpop.f32.mrf.mxu0
      %v309 = vadd.f32 %v260, %v308
      %v310 = vpop.f32.mrf.mxu0
      %v311 = vadd.f32 %v265, %v310
      %312 = vdwg.mxu0
      %313 = vmatpush.bf16.msra.mxu0 0
      %314 = vmatpush.bf16.msra.mxu0 0
      %315 = vmatpush.bf16.msra.mxu0 0
      %316 = vmatpush.bf16.msra.mxu0 0
      %317 = vmatpush.bf16.msra.mxu0 0
      %318 = vmatpush.bf16.msra.mxu0 0
      %319 = vmatpush.bf16.msra.mxu0 0
      %320 = vmatpush.bf16.msra.mxu0 %v292
      %321 = vmatmul.bf16.gmra.mxu0 %v279
      %v322 = vpop.f32.mrf.mxu0
      %v323 = vadd.f32 %v250, %v322
      %v324 = vpop.f32.mrf.mxu0
      %v325 = vadd.f32 %v255, %v324
      %326 = vmatmul.bf16.gmra.mxu0 %v282
      %v327 = vpop.f32.mrf.mxu0
      %v328 = vadd.f32 %v260, %v327
      %v329 = vpop.f32.mrf.mxu0
      %v330 = vadd.f32 %v265, %v329
      %331 = vdwg.mxu0
      %v332 = vmax.f32 %v304, 0.0
      %v333 = vmax.f32 %v323, 0.0
      %v334 = vmax.f32 %v306, 0.0
      %v335 = vmax.f32 %v325, 0.0
      %v336 = vmax.f32 %v309, 0.0
      %v337 = vmax.f32 %v328, 0.0
      %v338 = vmax.f32 %v311, 0.0
      %v339 = vmax.f32 %v330, 0.0
      %v340 = vpack.c.bf16 %v334, %v332
      %v341 = vpack.c.bf16 %v335, %v333
      %v342 = vpack.c.bf16 %v338, %v336
      %v343 = vpack.c.bf16 %v339, %v337
      %345 = vset.pattern.permute.xlu0 0
      %346 = vperm.xlu0 %345, %v232
      %v347 = vpop.permute.xlu0 %346
      %350 = vset.pattern.permute.xlu0 0
      %351 = vperm.xlu0 %350, %v233
      %v352 = vpop.permute.xlu0 %351
      %355 = vset.pattern.permute.xlu0 0
      %356 = vperm.xlu0 %355, %v234
      %v357 = vpop.permute.xlu0 %356
      %360 = vset.pattern.permute.xlu0 0
      %361 = vperm.xlu0 %360, %v235
      %v362 = vpop.permute.xlu0 %361
      %v368 = vunpack.c.l.b16 %v216
      %v369 = vunpack.c.l.b16 %v217
      %v370 = vunpack.c.l.b16 %v218
      %v371 = vunpack.c.l.b16 %v219
      %v372 = vpack.c.b16 %v369, %v368
      %v373 = vpack.c.b16 %v371, %v370
      %vm374 = vcmask 261120
      %v376 = vsel %vm374, %v372, 0
      %v379 = vsel %vm374, %v373, 0
      %381 = vmatpush.bf16.msra.mxu0 0
      %382 = vmatpush.bf16.msra.mxu0 0
      %383 = vmatpush.bf16.msra.mxu0 0
      %384 = vmatpush.bf16.msra.mxu0 0
      %385 = vmatpush.bf16.msra.mxu0 0
      %386 = vmatpush.bf16.msra.mxu0 0
      %387 = vmatpush.bf16.msra.mxu0 %v342
      %388 = vmatpush.bf16.msra.mxu0 %v340
      %389 = vmatmul.bf16.gmra.mxu0 %v376
      %v390 = vpop.f32.mrf.mxu0
      %v391 = vadd.f32 %v347, %v390
      %v392 = vpop.f32.mrf.mxu0
      %v393 = vadd.f32 %v352, %v392
      %394 = vmatmul.bf16.gmra.mxu0 %v379
      %v395 = vpop.f32.mrf.mxu0
      %v396 = vadd.f32 %v357, %v395
      %v397 = vpop.f32.mrf.mxu0
      %v398 = vadd.f32 %v362, %v397
      %399 = vdwg.mxu0
      %400 = vmatpush.bf16.msra.mxu0 0
      %401 = vmatpush.bf16.msra.mxu0 0
      %402 = vmatpush.bf16.msra.mxu0 0
      %403 = vmatpush.bf16.msra.mxu0 0
      %404 = vmatpush.bf16.msra.mxu0 0
      %405 = vmatpush.bf16.msra.mxu0 0
      %406 = vmatpush.bf16.msra.mxu0 %v343
      %407 = vmatpush.bf16.msra.mxu0 %v341
      %408 = vmatmul.bf16.gmra.mxu0 %v376
      %v409 = vpop.f32.mrf.mxu0
      %v410 = vadd.f32 %v347, %v409
      %v411 = vpop.f32.mrf.mxu0
      %v412 = vadd.f32 %v352, %v411
      %413 = vmatmul.bf16.gmra.mxu0 %v379
      %v414 = vpop.f32.mrf.mxu0
      %v415 = vadd.f32 %v357, %v414
      %v416 = vpop.f32.mrf.mxu0
      %v417 = vadd.f32 %v362, %v416
      %418 = vdwg.mxu0
      %v419 = vmax.f32 %v391, 0.0
      %v420 = vmax.f32 %v410, 0.0
      %v421 = vmax.f32 %v393, 0.0
      %v422 = vmax.f32 %v412, 0.0
      %v423 = vmax.f32 %v396, 0.0
      %v424 = vmax.f32 %v415, 0.0
      %v425 = vmax.f32 %v398, 0.0
      %v426 = vmax.f32 %v417, 0.0
      %v427 = vpack.c.bf16 %v421, %v419
      %v428 = vpack.c.bf16 %v422, %v420
      %v429 = vpack.c.bf16 %v425, %v423
      %v430 = vpack.c.bf16 %v426, %v424
      %432 = vset.pattern.permute.xlu0 0
      %433 = vperm.xlu0 %432, %v237
      %v434 = vpop.permute.xlu0 %433
      %437 = vset.pattern.permute.xlu0 0
      %438 = vperm.xlu0 %437, %v238
      %v439 = vpop.permute.xlu0 %438
      %442 = vset.pattern.permute.xlu0 0
      %443 = vperm.xlu0 %442, %v239
      %v444 = vpop.permute.xlu0 %443
      %447 = vset.pattern.permute.xlu0 0
      %448 = vperm.xlu0 %447, %v240
      %v449 = vpop.permute.xlu0 %448
      %v455 = vunpack.c.l.b16 %v221
      %v456 = vunpack.c.l.b16 %v222
      %v457 = vunpack.c.l.b16 %v223
      %v458 = vunpack.c.l.b16 %v224
      %v459 = vpack.c.b16 %v456, %v455
      %v460 = vpack.c.b16 %v458, %v457
      %v462 = vsel %vm374, %v459, 0
      %v465 = vsel %vm374, %v460, 0
      %467 = vmatpush.bf16.msra.mxu0 0
      %468 = vmatpush.bf16.msra.mxu0 0
      %469 = vmatpush.bf16.msra.mxu0 0
      %470 = vmatpush.bf16.msra.mxu0 0
      %471 = vmatpush.bf16.msra.mxu0 0
      %472 = vmatpush.bf16.msra.mxu0 0
      %473 = vmatpush.bf16.msra.mxu0 %v429
      %474 = vmatpush.bf16.msra.mxu0 %v427
      %475 = vmatmul.bf16.gmra.mxu0 %v462
      %v476 = vpop.f32.mrf.mxu0
      %v477 = vadd.f32 %v434, %v476
      %v478 = vpop.f32.mrf.mxu0
      %v479 = vadd.f32 %v439, %v478
      %480 = vmatmul.bf16.gmra.mxu0 %v465
      %v481 = vpop.f32.mrf.mxu0
      %v482 = vadd.f32 %v444, %v481
      %v483 = vpop.f32.mrf.mxu0
      %v484 = vadd.f32 %v449, %v483
      %485 = vdwg.mxu0
      %486 = vmatpush.bf16.msra.mxu0 0
      %487 = vmatpush.bf16.msra.mxu0 0
      %488 = vmatpush.bf16.msra.mxu0 0
      %489 = vmatpush.bf16.msra.mxu0 0
      %490 = vmatpush.bf16.msra.mxu0 0
      %491 = vmatpush.bf16.msra.mxu0 0
      %492 = vmatpush.bf16.msra.mxu0 %v430
      %493 = vmatpush.bf16.msra.mxu0 %v428
      %494 = vmatmul.bf16.gmra.mxu0 %v462
      %v495 = vpop.f32.mrf.mxu0
      %v496 = vadd.f32 %v434, %v495
      %v497 = vpop.f32.mrf.mxu0
      %v498 = vadd.f32 %v439, %v497
      %499 = vmatmul.bf16.gmra.mxu0 %v465
      %v500 = vpop.f32.mrf.mxu0
      %v501 = vadd.f32 %v444, %v500
      %v502 = vpop.f32.mrf.mxu0
      %v503 = vadd.f32 %v449, %v502
      %504 = vdwg.mxu0
      %v505 = vmax.f32 %v477, 0.0
      %v506 = vmax.f32 %v496, 0.0
      %v507 = vmax.f32 %v479, 0.0
      %v508 = vmax.f32 %v498, 0.0
      %v509 = vmax.f32 %v482, 0.0
      %v510 = vmax.f32 %v501, 0.0
      %v511 = vmax.f32 %v484, 0.0
      %v512 = vmax.f32 %v503, 0.0
      %v513 = vpack.c.bf16 %v507, %v505
      %v514 = vpack.c.bf16 %v508, %v506
      %v515 = vpack.c.bf16 %v511, %v509
      %v516 = vpack.c.bf16 %v512, %v510
      %518 = vset.pattern.permute.xlu0 0
      %519 = vperm.xlu0 %518, %v242
      %v520 = vpop.permute.xlu0 %519
      %v523 = vsel %vm374, %v226, 0
      %525 = vmatpush.bf16.msra.mxu0 0
      %526 = vmatpush.bf16.msra.mxu0 0
      %527 = vmatpush.bf16.msra.mxu0 0
      %528 = vmatpush.bf16.msra.mxu0 0
      %529 = vmatpush.bf16.msra.mxu0 0
      %530 = vmatpush.bf16.msra.mxu0 0
      %531 = vmatpush.bf16.msra.mxu0 %v515
      %532 = vmatpush.bf16.msra.mxu0 %v513
      %533 = vmatmul.bf16.gmra.mxu0 %v523
      %v534 = vpop.f32.mrf.mxu0
      %v535 = vadd.f32 %v520, %v534
      %v536 = vpop.f32.mrf.mxu0
      %537 = vdwg.mxu0
      %538 = vmatpush.bf16.msra.mxu0 0
      %539 = vmatpush.bf16.msra.mxu0 0
      %540 = vmatpush.bf16.msra.mxu0 0
      %541 = vmatpush.bf16.msra.mxu0 0
      %542 = vmatpush.bf16.msra.mxu0 0
      %543 = vmatpush.bf16.msra.mxu0 0
      %544 = vmatpush.bf16.msra.mxu0 %v516
      %545 = vmatpush.bf16.msra.mxu0 %v514
      %546 = vmatmul.bf16.gmra.mxu0 %v523
      %v547 = vpop.f32.mrf.mxu0
      %v548 = vadd.f32 %v520, %v547
      %v549 = vpop.f32.mrf.mxu0
      %550 = vdwg.mxu0
      %v551 = vadd.f32 %v535, %v243
      %v552 = vadd.f32 %v548, %v244
      %v555 = vrot.slane %v552, 4
      %vm556 = vcmask 1043456
      %v557 = vsel %vm556, %v551, %v555
      %559 = vst [vmem:[%s208] sm:$0x77] %v557
      %s560 = smul.u32 2, %s19
      %p561 = scmp.lt.s32.totalorder %s18, 1
      %s562 = scalar_select %p561, %s18, 1
      %p563 = scmp.lt.s32.totalorder %s560, 1
      %s564 = scalar_select %p563, %s560, 1
      %s565 = smul.addr %s562, 2
      %s566 = sadd.s32 %s564, %s565
      %s567 = smul.addr %s566, 4
      %s568 = scalar_lea.vmem %s3, %s567
      // Predicated region
      $region33: #{dcnn_forward.1} parent=31 // pred_check
        %p569 = pneg %p116
      $region34: #{dcnn_forward.1} parent=31 // pred_check_branch
        %571 = sbr.rel (%p569) target = $region36
      $region35: #{dcnn_forward.1} parent=31 // pred_region
        %s572 = smul.u32 2, %s19
      $region36: #{dcnn_forward.1} parent=31 // pred_fallthru
        _
    $region32: #{dcnn_forward.1} parent=5 // pred_fallthru
      _
    %p573 = scmp.le.s32.totalorder 2, %s9
    // Predicated region
    $region37: #{dcnn_forward.1} parent=5 // pred_check
      %p574 = pneg %p573
    $region38: #{dcnn_forward.1} parent=5 // pred_check_branch
      %576 = sbr.rel (%p574) target = $region40
    $region39: #{dcnn_forward.1} parent=5 // pred_region
      %s577 = ssub.s32 %s9, 2
      // Predicated region
      $region41: #{dcnn_forward.1} parent=39 // pred_check
        %p578 = pneg %p122
      $region42: #{dcnn_forward.1} parent=39 // pred_check_branch
        %580 = sbr.rel (%p578) target = $region44
      $region43: #{dcnn_forward.1} parent=39 // pred_region
        %s581 = smul.u32 2, %s21
        %p582 = scmp.lt.s32.totalorder %s20, 1
        %s583 = scalar_select %p582, %s20, 1
        %p584 = scmp.lt.s32.totalorder %s581, 1
        %s585 = scalar_select %p584, %s581, 1
        %s586 = smul.addr %s583, 2
        %s587 = sadd.s32 %s585, %s586
        %s588 = smul.addr %s587, 4
        %s589 = scalar_lea.vmem %s3, %s588
      $region44: #{dcnn_forward.1} parent=39 // pred_fallthru
        _
    $region40: #{dcnn_forward.1} parent=5 // pred_fallthru
      _
  $region6: #{dcnn_forward.1} parent=0 // loop_footer
    %s13 = sadd.s32 1, %s9
  $region7: #{dcnn_forward.1} parent=0 // loop_footer_branch
    %8 = sbr.rel target = $region3
  $region8: #{dcnn_forward.1} parent=0 // loop_exit
    _

</llo_original>
